<compile_context>
chip_gen: v7x
topology: tpu7x:2x2x1
jax: 0.10.0
libtpu: 0.0.40
codegen_flags: <defaults>
</compile_context>

<pallas_src>
import functools

import jax
import jax.numpy as jnp
from jax.experimental import pallas as pl
from jax.experimental.pallas import tpu as pltpu


def _preadd_kernel(x_ref, p_ref, o_ref, *, w):
    """Wo >= 128 path: VPU row-pair sum, then one (W, Wo) MXU matmul."""
    x = x_ref[...]                       # (br, 2*W)
    s = x[:, :w] + x[:, w:]              # vertical 2x1 sum, cheap VPU add
    o_ref[...] = jnp.dot(
        s, p_ref[...], preferred_element_type=jnp.float32
    ).astype(o_ref.dtype)


def _packed_kernel(x_ref, p_ref, o_ref):
    """Wo < 128 path: G output rows packed per slab row, one dense matmul."""
    o_ref[...] = jnp.dot(
        x_ref[...], p_ref[...], preferred_element_type=jnp.float32
    ).astype(o_ref.dtype)


def _pool_matrix_preadd(w, wo, dtype):
    """(W, Wo): 0.25 where the input column's pair index equals the output col."""
    pair = jnp.arange(w, dtype=jnp.int32) // 2
    p = (pair[:, None] == jnp.arange(wo, dtype=jnp.int32)[None, :]).astype(jnp.float32)
    return (0.25 * p).astype(dtype)


def _pool_matrix_packed(w, wo, g, dtype):
    """(G*2*W, G*Wo) block-diagonal: four 0.25 entries per output column."""
    r = jnp.arange(g * 2 * w, dtype=jnp.int32)
    col_of_row = (r // (2 * w)) * wo + (r % w) // 2
    c = jnp.arange(g * wo, dtype=jnp.int32)
    p = (col_of_row[:, None] == c[None, :]).astype(jnp.float32)
    return (0.25 * p).astype(dtype)


def _pick_pack_factor(n_rows, wo):
    """Packing factor G (a divisor of n_rows) giving a lane-dense output width."""
    if wo >= 128:
        return 1
    # Only small G are useful (Cout = G*Wo stays near 128-256); bounded search.
    g_max = min(n_rows, max(1, 1024 // wo))
    divisors = [g for g in range(1, g_max + 1) if n_rows % g == 0]
    exact = [g for g in divisors
             if g * wo >= 128 and (g * wo) % 128 == 0 and g * wo <= 256]
    if exact:                      # unmasked, fully lane-aligned stores
        return exact[0]
    dense = [g for g in divisors if g * wo >= 128]
    if dense:                      # >=128 lanes (at most one partially masked vreg)
        return dense[0]
    # TODO(synk): pathological row counts (no divisor reaches 128 lanes) would
    # need row padding; fall back to the widest available packing.
    return divisors[-1]


def _pick_block_rows(n_rows, row_in_bytes, row_out_bytes, p_bytes, itemsize):
    """Rows per grid step: big HBM-roofline tiles, per-generation VMEM safe."""
    vmem_cap = 28 << 20          # total working-set budget, safe on v5e/v6e/v7x
    tile_budget = 8 << 20        # target input tile size
    min_big_tile = 4 << 20       # never shrink below this just to add steps

    br = max(1, tile_budget // row_in_bytes)
    vmem_rows = max(1, (vmem_cap - 2 * p_bytes) // (2 * (row_in_bytes + row_out_bytes)))
    br = min(br, vmem_rows)

    # Keep >=8 (or >=4) grid steps so both v7x TensorCores stream concurrently,
    # but only when tiles stay >= 4 MiB (single-TC v5e/v6e would only lose).
    for steps in (8, 4):
        cand = pl.cdiv(n_rows, steps)
        if cand * row_in_bytes >= min_big_tile:
            br = min(br, cand)
            break

    align = max(8, 32 // itemsize)      # sublane packing: 8 f32 / 16 bf16 / 32 int8
    if br < n_rows:
        br = max(align, (br // align) * align)
    return min(br, n_rows)


def downsample(x):
    """AvgPool2d(kernel_size=2, stride=2) on NCHW input (even H, W)."""
    if not jnp.issubdtype(x.dtype, jnp.floating):
        # TODO(synk): integer inputs would truncate the average on the final cast;
        # nn.AvgPool2d is float-only, so reject explicitly.
        raise TypeError("downsample supports floating-point inputs only")
    n, c, h, w = x.shape
    assert h % 2 == 0 and w % 2 == 0, "spatial dims must be even"
    ho, wo = h // 2, w // 2
    n_out_rows = n * c * ho
    itemsize = jnp.dtype(x.dtype).itemsize

    g = _pick_pack_factor(n_out_rows, wo)

    if g == 1:
        # Plain rows; halve the MXU contraction with a VPU pre-add of the row pair.
        cin, cout, k = 2 * w, wo, w
        xg = x.reshape(n_out_rows, cin)
        pool = _pool_matrix_preadd(w, wo, x.dtype)
        kernel = functools.partial(_preadd_kernel, w=w)
        flops = n_out_rows * (w + 2 * w * wo)
    else:
        # Pack G output rows per slab row so the output lane width is >= 128.
        cin, cout, k = g * 2 * w, g * wo, g * 2 * w
        xg = x.reshape(n_out_rows // g, cin)
        pool = _pool_matrix_packed(w, wo, g, x.dtype)
        kernel = _packed_kernel
        flops = 2 * (n_out_rows // g) * cin * cout
    r = xg.shape[0]
    p_bytes = k * cout * itemsize

    br = _pick_block_rows(r, cin * itemsize, cout * itemsize, p_bytes, itemsize)
    grid = (pl.cdiv(r, br),)

    # VMEM: double-buffered in/out tiles + (conservatively double-counted) P.
    # TODO(synk): very large Wo (f32 Wo >~ 1536) would need a second grid axis
    # tiling the W/Wo lanes to keep P inside v7x's smaller VMEM.
    needed = 2 * br * (cin + cout) * itemsize + 2 * p_bytes
    vmem_limit = int(min(max(32 << 20, needed + (4 << 20)), 100 << 20))

    cost = pl.CostEstimate(
        flops=int(flops),
        transcendentals=0,
        bytes_accessed=int(r * (cin + cout) * itemsize + p_bytes),
    )

    out_packed = pl.pallas_call(
        kernel,
        out_shape=jax.ShapeDtypeStruct((r, cout), x.dtype),
        grid_spec=pltpu.PrefetchScalarGridSpec(
            num_scalar_prefetch=0,
            grid=grid,
            in_specs=[
                pl.BlockSpec((br, cin), lambda i: (i, 0)),   # streamed data tiles
                pl.BlockSpec((k, cout), lambda i: (0, 0)),   # pooling matrix, resident
            ],
            out_specs=pl.BlockSpec((br, cout), lambda i: (i, 0)),
        ),
        compiler_params=pltpu.CompilerParams(
            dimension_semantics=("parallel",),
            vmem_limit_bytes=vmem_limit,
        ),
        cost_estimate=cost,
    )(xg, pool)

    return out_packed.reshape(n, c, ho, wo)


if __name__ == "__main__":
    # Small-Wo (packed) path — the module's typical NCHW usage.
    x = jax.random.normal(jax.random.PRNGKey(0), (2, 4, 16, 16), dtype=jnp.float32)
    out = jax.block_until_ready(downsample(x))
    ref = x.reshape(2, 4, 8, 2, 8, 2).mean(axis=(3, 5))
    assert out.shape == (2, 4, 8, 8)
    assert jnp.allclose(out, ref, atol=1e-5, rtol=1e-5)

    # Wide-row (pre-add) path — Wo >= 128.
    x2 = jax.random.normal(jax.random.PRNGKey(0), (1, 2, 4, 256), dtype=jnp.float32)
    out2 = jax.block_until_ready(downsample(x2))
    ref2 = x2.reshape(1, 2, 2, 2, 128, 2).mean(axis=(3, 5))
    assert out2.shape == (1, 2, 2, 128)
    assert jnp.allclose(out2, ref2, atol=1e-5, rtol=1e-5)

    print("KERNEL_OK")
</pallas_src>

<mosaic_0001>
module attributes {stable_mosaic.version = 11 : i64} {
  func.func @_packed_kernel(%arg0: i32, %arg1: memref<4x512xf32, #tpu.memory_space<vmem>>, %arg2: memref<512x128xf32, #tpu.memory_space<vmem>>, %arg3: memref<4x128xf32, #tpu.memory_space<vmem>>) attributes {dimension_semantics = [#tpu.dimension_semantics<parallel>], iteration_bounds = array<i64: 1>, scalar_prefetch = 0 : i64, scratch_operands = 0 : i64, tpu.core_type = #tpu.core_type<tc>, window_params = [{transform_indices = @transform_0, window_bounds = array<i64: 4, 512>}, {pipeline_mode = #tpu.pipeline_mode<synchronous>, transform_indices = @transform_1, window_bounds = array<i64: 512, 128>}, {transform_indices = @transform_2, window_bounds = array<i64: 4, 128>}]} {
    %c0 = arith.constant 0 : index
    %c0_0 = arith.constant 0 : index
    %0 = vector.load %arg1[%c0, %c0_0] : memref<4x512xf32, #tpu.memory_space<vmem>>, vector<4x512xf32>
    %c0_1 = arith.constant 0 : index
    %c0_2 = arith.constant 0 : index
    %1 = vector.load %arg2[%c0_1, %c0_2] : memref<512x128xf32, #tpu.memory_space<vmem>>, vector<512x128xf32>
    %cst = arith.constant dense<0.000000e+00> : vector<4x128xf32>
    %2 = tpu.matmul %0, %1, %cst {dimension_numbers = #tpu.dot_dimension_numbers<[1], [0], [0], [1], [0, 0, 1, 1], [], []>} : vector<4x512xf32>, vector<512x128xf32>, vector<4x128xf32> -> vector<4x128xf32>
    %c0_3 = arith.constant 0 : index
    %c0_4 = arith.constant 0 : index
    %3 = vector.load %arg3[%c0_3, %c0_4] : memref<4x128xf32, #tpu.memory_space<vmem>>, vector<4x128xf32>
    tpu.vector_store %arg3[%c0_3, %c0_4], %2 {strides = array<i32>} : memref<4x128xf32, #tpu.memory_space<vmem>>, vector<4x128xf32>,
    return
  }
  func.func @transform_0(%arg0: i32) -> (i32, i32) {
    %c0_i32 = arith.constant 0 : i32
    %c0_i32_0 = arith.constant 0 : i32
    return %arg0, %c0_i32 : i32, i32
  }
  func.func @transform_1(%arg0: i32) -> (i32, i32) {
    %c0_i32 = arith.constant 0 : i32
    %c0_i32_0 = arith.constant 0 : i32
    %c0_i32_1 = arith.constant 0 : i32
    return %c0_i32, %c0_i32_0 : i32, i32
  }
  func.func @transform_2(%arg0: i32) -> (i32, i32) {
    %c0_i32 = arith.constant 0 : i32
    %c0_i32_0 = arith.constant 0 : i32
    return %arg0, %c0_i32 : i32, i32
  }
}

</mosaic_0001>

<llo_original>
// kernel: tpu_custom_call.1
$region0: #{tpu_custom_call.1}
  #allocation0 [shape = 'u32[]', space=smem, size = 0x4, offset = 0x4, fixed_abs, tag = 'smem constant byte address 0x4 - core index']
  #allocation1 [shape = 'u32[144,128]{1,0:T(1,128)}', space=vmem, size = 0x12000, scoped, tag = 'internal scratch']
  %s0 = inlined_call_operand.hbm [shape: f32[4,512], index: 0, kind: input, shape index: {}]
  %s1 = inlined_call_operand.hbm [shape: f32[512,128], index: 1, kind: input, shape index: {}]
  %s2 = inlined_call_operand.hbm [shape: f32[4,128], index: 2, kind: output, shape index: {}]
  %s3 = sld [smem:[#allocation0]]
  $region26: #{tpu_custom_call.1} parent=0
    _
  %s5 = ssub.s32 1, %s3
  %s6 = scalar_select 0, %s5, %s3
  $region1: #{tpu_custom_call.1} parent=0
    #allocation2 [shape = 'u8[8192]{0}', space=vmem, size = 0x2000, scoped, tag = 'input window, operand 0, single buffered']
    #allocation3 [shape = 's32[1]{0}', space=sflag, size = 0x4, scoped, tag = 'scoped memory for tpu_custom_call.1']
    #allocation4 [shape = 's32[1]{0}', space=sflag, size = 0x4, scoped, tag = 'scoped memory for tpu_custom_call.1']
    #allocation5 [shape = 'u8[262144]{0}', space=vmem, size = 0x40000, scoped, tag = 'input window, operand 1, single buffered']
    #allocation6 [shape = 's32[1]{0}', space=sflag, size = 0x4, scoped, tag = 'scoped memory for tpu_custom_call.1']
    #allocation7 [shape = 'u8[2048]{0}', space=vmem, size = 0x800, scoped, tag = 'output window, operand 0, single buffered']
    %7 = vsyncpa [#allocation3], 0
    %8 = vsyncpa [#allocation6], 0
    %9 = vsyncpa [#allocation4], 0
    // Predicated region
    $region2: #{tpu_custom_call.1} parent=1 // pred_check
      _
    $region3: #{tpu_custom_call.1} parent=1 // pred_check_branch
      %11 = sbr.rel (0) target = $region5
    $region4: #{tpu_custom_call.1} parent=1 // pred_region
      %s13 = ssub.s32 256, 256
      %14 = vsyncadd [#allocation3], %s13
      %s16 = sshll.u32 [#allocation2], 4
      %s17 = int_to_ptr.vmem [resolvable:$true] %s16
      %19 = dma.hbm_to_vmem [thread:$0]  %s0, 256, %s17, [#allocation3]
    $region5: #{tpu_custom_call.1} parent=1 // pred_fallthru
      _
    // Predicated region
    $region6: #{tpu_custom_call.1} parent=1 // pred_check
      _
    $region7: #{tpu_custom_call.1} parent=1 // pred_check_branch
      %21 = sbr.rel (0) target = $region9
    $region8: #{tpu_custom_call.1} parent=1 // pred_region
      %s23 = ssub.s32 8192, 8192
      %24 = vsyncadd [#allocation6], %s23
      %s25 = sshll.u32 [#allocation5], 4
      %s26 = int_to_ptr.vmem [resolvable:$true] %s25
      %31 = dma.hbm_to_vmem [thread:$0]  %s1, 8192, %s26, [#allocation6], 128, 128, 8
    $region9: #{tpu_custom_call.1} parent=1 // pred_fallthru
      _
    // Predicated region
    $region10: #{tpu_custom_call.1} parent=1 // pred_check
      _
    $region11: #{tpu_custom_call.1} parent=1 // pred_check_branch
      %33 = sbr.rel (0) target = $region13
    $region12: #{tpu_custom_call.1} parent=1 // pred_region
      %34 = dma.done [#allocation3], 256
    $region13: #{tpu_custom_call.1} parent=1 // pred_fallthru
      _
    // Predicated region
    $region14: #{tpu_custom_call.1} parent=1 // pred_check
      _
    $region15: #{tpu_custom_call.1} parent=1 // pred_check_branch
      %36 = sbr.rel (0) target = $region17
    $region16: #{tpu_custom_call.1} parent=1 // pred_region
      %37 = dma.done [#allocation6], 8192
    $region17: #{tpu_custom_call.1} parent=1 // pred_fallthru
      _
    %v38 = vld [vmem:[#allocation2] sm:$0xff]
    %v39 = vld [vmem:[#allocation2 + $0x8] sm:$0xff]
    %v40 = vld [vmem:[#allocation5] sm:$0xff]
    %v41 = vld [vmem:[#allocation5 + $0x8] sm:$0xff]
    %v42 = vld [vmem:[#allocation5 + $0x10] sm:$0xff]
    %v43 = vld [vmem:[#allocation5 + $0x18] sm:$0xff]
    %v44 = vld [vmem:[#allocation5 + $0x20] sm:$0xff]
    %v45 = vld [vmem:[#allocation5 + $0x28] sm:$0xff]
    %v46 = vld [vmem:[#allocation5 + $0x30] sm:$0xff]
    %v47 = vld [vmem:[#allocation5 + $0x38] sm:$0xff]
    %v48 = vld [vmem:[#allocation5 + $0x40] sm:$0xff]
    %v49 = vld [vmem:[#allocation5 + $0x48] sm:$0xff]
    %v50 = vld [vmem:[#allocation5 + $0x50] sm:$0xff]
    %v51 = vld [vmem:[#allocation5 + $0x58] sm:$0xff]
    %v52 = vld [vmem:[#allocation5 + $0x60] sm:$0xff]
    %v53 = vld [vmem:[#allocation5 + $0x68] sm:$0xff]
    %v54 = vld [vmem:[#allocation5 + $0x70] sm:$0xff]
    %v55 = vld [vmem:[#allocation5 + $0x78] sm:$0xff]
    %v56 = vld [vmem:[#allocation5 + $0x80] sm:$0xff]
    %v57 = vld [vmem:[#allocation5 + $0x88] sm:$0xff]
    %v58 = vld [vmem:[#allocation5 + $0x90] sm:$0xff]
    %v59 = vld [vmem:[#allocation5 + $0x98] sm:$0xff]
    %v60 = vld [vmem:[#allocation5 + $0xa0] sm:$0xff]
    %v61 = vld [vmem:[#allocation5 + $0xa8] sm:$0xff]
    %v62 = vld [vmem:[#allocation5 + $0xb0] sm:$0xff]
    %v63 = vld [vmem:[#allocation5 + $0xb8] sm:$0xff]
    %v64 = vld [vmem:[#allocation5 + $0xc0] sm:$0xff]
    %v65 = vld [vmem:[#allocation5 + $0xc8] sm:$0xff]
    %v66 = vld [vmem:[#allocation5 + $0xd0] sm:$0xff]
    %v67 = vld [vmem:[#allocation5 + $0xd8] sm:$0xff]
    %v68 = vld [vmem:[#allocation5 + $0xe0] sm:$0xff]
    %v69 = vld [vmem:[#allocation5 + $0xe8] sm:$0xff]
    %v70 = vld [vmem:[#allocation5 + $0xf0] sm:$0xff]
    %v71 = vld [vmem:[#allocation5 + $0xf8] sm:$0xff]
    %v72 = vld [vmem:[#allocation5 + $0x100] sm:$0xff]
    %v73 = vld [vmem:[#allocation5 + $0x108] sm:$0xff]
    %v74 = vld [vmem:[#allocation5 + $0x110] sm:$0xff]
    %v75 = vld [vmem:[#allocation5 + $0x118] sm:$0xff]
    %v76 = vld [vmem:[#allocation5 + $0x120] sm:$0xff]
    %v77 = vld [vmem:[#allocation5 + $0x128] sm:$0xff]
    %v78 = vld [vmem:[#allocation5 + $0x130] sm:$0xff]
    %v79 = vld [vmem:[#allocation5 + $0x138] sm:$0xff]
    %v80 = vld [vmem:[#allocation5 + $0x140] sm:$0xff]
    %v81 = vld [vmem:[#allocation5 + $0x148] sm:$0xff]
    %v82 = vld [vmem:[#allocation5 + $0x150] sm:$0xff]
    %v83 = vld [vmem:[#allocation5 + $0x158] sm:$0xff]
    %v84 = vld [vmem:[#allocation5 + $0x160] sm:$0xff]
    %v85 = vld [vmem:[#allocation5 + $0x168] sm:$0xff]
    %v86 = vld [vmem:[#allocation5 + $0x170] sm:$0xff]
    %v87 = vld [vmem:[#allocation5 + $0x178] sm:$0xff]
    %v88 = vld [vmem:[#allocation5 + $0x180] sm:$0xff]
    %v89 = vld [vmem:[#allocation5 + $0x188] sm:$0xff]
    %v90 = vld [vmem:[#allocation5 + $0x190] sm:$0xff]
    %v91 = vld [vmem:[#allocation5 + $0x198] sm:$0xff]
    %v92 = vld [vmem:[#allocation5 + $0x1a0] sm:$0xff]
    %v93 = vld [vmem:[#allocation5 + $0x1a8] sm:$0xff]
    %v94 = vld [vmem:[#allocation5 + $0x1b0] sm:$0xff]
    %v95 = vld [vmem:[#allocation5 + $0x1b8] sm:$0xff]
    %v96 = vld [vmem:[#allocation5 + $0x1c0] sm:$0xff]
    %v97 = vld [vmem:[#allocation5 + $0x1c8] sm:$0xff]
    %v98 = vld [vmem:[#allocation5 + $0x1d0] sm:$0xff]
    %v99 = vld [vmem:[#allocation5 + $0x1d8] sm:$0xff]
    %v100 = vld [vmem:[#allocation5 + $0x1e0] sm:$0xff]
    %v101 = vld [vmem:[#allocation5 + $0x1e8] sm:$0xff]
    %v102 = vld [vmem:[#allocation5 + $0x1f0] sm:$0xff]
    %v103 = vld [vmem:[#allocation5 + $0x1f8] sm:$0xff]
    %v106 = vcombine.high %v38, %v38
    %v107 = vcombine.high %v39, %v39
    %110 = vmatprep.subr.mxu0 0.0
    %111 = vmatpush1.msra.mxu0 %v40
    %112 = vmatprep.subr.mxu0 0.0
    %113 = vmatpush1.msra.mxu0 %v41
    %114 = vmatprep.subr.mxu0 0.0
    %115 = vmatpush1.msra.mxu0 %v42
    %116 = vmatprep.subr.mxu0 0.0
    %117 = vmatpush1.msra.mxu0 %v43
    %118 = vmatprep.subr.mxu0 0.0
    %119 = vmatpush1.msra.mxu0 %v44
    %120 = vmatprep.subr.mxu0 0.0
    %121 = vmatpush1.msra.mxu0 %v45
    %122 = vmatprep.subr.mxu0 0.0
    %123 = vmatpush1.msra.mxu0 %v46
    %124 = vmatprep.subr.mxu0 0.0
    %125 = vmatpush1.msra.mxu0 %v47
    %126 = vmatprep.subr.mxu0 0.0
    %127 = vmatpush1.msra.mxu0 %v48
    %128 = vmatprep.subr.mxu0 0.0
    %129 = vmatpush1.msra.mxu0 %v49
    %130 = vmatprep.subr.mxu0 0.0
    %131 = vmatpush1.msra.mxu0 %v50
    %132 = vmatprep.subr.mxu0 0.0
    %133 = vmatpush1.msra.mxu0 %v51
    %134 = vmatprep.subr.mxu0 0.0
    %135 = vmatpush1.msra.mxu0 %v52
    %136 = vmatprep.subr.mxu0 0.0
    %137 = vmatpush1.msra.mxu0 %v53
    %138 = vmatprep.subr.mxu0 0.0
    %139 = vmatpush1.msra.mxu0 %v54
    %140 = vmatprep.subr.mxu0 0.0
    %141 = vmatpush1.msra.mxu0 %v55
    %142 = vmatprep.subr.mxu0 0.0
    %143 = vmatpush1.msra.mxu0 %v56
    %144 = vmatprep.subr.mxu0 0.0
    %145 = vmatpush1.msra.mxu0 %v57
    %146 = vmatprep.subr.mxu0 0.0
    %147 = vmatpush1.msra.mxu0 %v58
    %148 = vmatprep.subr.mxu0 0.0
    %149 = vmatpush1.msra.mxu0 %v59
    %150 = vmatprep.subr.mxu0 0.0
    %151 = vmatpush1.msra.mxu0 %v60
    %152 = vmatprep.subr.mxu0 0.0
    %153 = vmatpush1.msra.mxu0 %v61
    %154 = vmatprep.subr.mxu0 0.0
    %155 = vmatpush1.msra.mxu0 %v62
    %156 = vmatprep.subr.mxu0 0.0
    %157 = vmatpush1.msra.mxu0 %v63
    %158 = vmatprep.subr.mxu0 0.0
    %159 = vmatpush1.msra.mxu0 %v64
    %160 = vmatprep.subr.mxu0 0.0
    %161 = vmatpush1.msra.mxu0 %v65
    %162 = vmatprep.subr.mxu0 0.0
    %163 = vmatpush1.msra.mxu0 %v66
    %164 = vmatprep.subr.mxu0 0.0
    %165 = vmatpush1.msra.mxu0 %v67
    %166 = vmatprep.subr.mxu0 0.0
    %167 = vmatpush1.msra.mxu0 %v68
    %168 = vmatprep.subr.mxu0 0.0
    %169 = vmatpush1.msra.mxu0 %v69
    %170 = vmatprep.subr.mxu0 0.0
    %171 = vmatpush1.msra.mxu0 %v70
    %172 = vmatprep.subr.mxu0 0.0
    %173 = vmatpush1.msra.mxu0 %v71
    %174 = vmatprep.mubr.f32.mxu0 %v106
    %175 = vmatmul.mubr.f32.gmra.mrb[0].mxu0 %v38
    %v176 = vpop.f32.mrb[0].mxu0
    %v177 = vadd.f32 0.0, %v176
    %v178 = vpop.f32.mrb[0].mxu0
    %179 = vdwg.mxu0
    %180 = vmatprep.subr.mxu0 0.0
    %181 = vmatpush1.msra.mxu0 %v72
    %182 = vmatprep.subr.mxu0 0.0
    %183 = vmatpush1.msra.mxu0 %v73
    %184 = vmatprep.subr.mxu0 0.0
    %185 = vmatpush1.msra.mxu0 %v74
    %186 = vmatprep.subr.mxu0 0.0
    %187 = vmatpush1.msra.mxu0 %v75
    %188 = vmatprep.subr.mxu0 0.0
    %189 = vmatpush1.msra.mxu0 %v76
    %190 = vmatprep.subr.mxu0 0.0
    %191 = vmatpush1.msra.mxu0 %v77
    %192 = vmatprep.subr.mxu0 0.0
    %193 = vmatpush1.msra.mxu0 %v78
    %194 = vmatprep.subr.mxu0 0.0
    %195 = vmatpush1.msra.mxu0 %v79
    %196 = vmatprep.subr.mxu0 0.0
    %197 = vmatpush1.msra.mxu0 %v80
    %198 = vmatprep.subr.mxu0 0.0
    %199 = vmatpush1.msra.mxu0 %v81
    %200 = vmatprep.subr.mxu0 0.0
    %201 = vmatpush1.msra.mxu0 %v82
    %202 = vmatprep.subr.mxu0 0.0
    %203 = vmatpush1.msra.mxu0 %v83
    %204 = vmatprep.subr.mxu0 0.0
    %205 = vmatpush1.msra.mxu0 %v84
    %206 = vmatprep.subr.mxu0 0.0
    %207 = vmatpush1.msra.mxu0 %v85
    %208 = vmatprep.subr.mxu0 0.0
    %209 = vmatpush1.msra.mxu0 %v86
    %210 = vmatprep.subr.mxu0 0.0
    %211 = vmatpush1.msra.mxu0 %v87
    %212 = vmatprep.subr.mxu0 0.0
    %213 = vmatpush1.msra.mxu0 %v88
    %214 = vmatprep.subr.mxu0 0.0
    %215 = vmatpush1.msra.mxu0 %v89
    %216 = vmatprep.subr.mxu0 0.0
    %217 = vmatpush1.msra.mxu0 %v90
    %218 = vmatprep.subr.mxu0 0.0
    %219 = vmatpush1.msra.mxu0 %v91
    %220 = vmatprep.subr.mxu0 0.0
    %221 = vmatpush1.msra.mxu0 %v92
    %222 = vmatprep.subr.mxu0 0.0
    %223 = vmatpush1.msra.mxu0 %v93
    %224 = vmatprep.subr.mxu0 0.0
    %225 = vmatpush1.msra.mxu0 %v94
    %226 = vmatprep.subr.mxu0 0.0
    %227 = vmatpush1.msra.mxu0 %v95
    %228 = vmatprep.subr.mxu0 0.0
    %229 = vmatpush1.msra.mxu0 %v96
    %230 = vmatprep.subr.mxu0 0.0
    %231 = vmatpush1.msra.mxu0 %v97
    %232 = vmatprep.subr.mxu0 0.0
    %233 = vmatpush1.msra.mxu0 %v98
    %234 = vmatprep.subr.mxu0 0.0
    %235 = vmatpush1.msra.mxu0 %v99
    %236 = vmatprep.subr.mxu0 0.0
    %237 = vmatpush1.msra.mxu0 %v100
    %238 = vmatprep.subr.mxu0 0.0
    %239 = vmatpush1.msra.mxu0 %v101
    %240 = vmatprep.subr.mxu0 0.0
    %241 = vmatpush1.msra.mxu0 %v102
    %242 = vmatprep.subr.mxu0 0.0
    %243 = vmatpush1.msra.mxu0 %v103
    %244 = vmatprep.mubr.f32.mxu0 %v107
    %245 = vmatmul.mubr.f32.gmra.mrb[0].mxu0 %v39
    %v246 = vpop.f32.mrb[0].mxu0
    %v247 = vadd.f32 %v177, %v246
    %v248 = vpop.f32.mrb[0].mxu0
    %249 = vdwg.mxu0
    %250 = vst [vmem:[#allocation7] sm:$0xf] %v247
    // Predicated region
    $region18: #{tpu_custom_call.1} parent=1 // pred_check
      _
    $region19: #{tpu_custom_call.1} parent=1 // pred_check_branch
      %252 = sbr.rel (0) target = $region21
    $region20: #{tpu_custom_call.1} parent=1 // pred_region
      %s254 = ssub.s32 64, 64
      %255 = vsyncadd [#allocation4], %s254
      %s257 = sshll.u32 [#allocation7], 4
      %s258 = int_to_ptr.vmem [resolvable:$true] %s257
      %260 = dma.vmem_to_hbm [thread:$0]  %s258, 64, %s2, [#allocation4]
    $region21: #{tpu_custom_call.1} parent=1 // pred_fallthru
      _
    // Predicated region
    $region22: #{tpu_custom_call.1} parent=1 // pred_check
      _
    $region23: #{tpu_custom_call.1} parent=1 // pred_check_branch
      %262 = sbr.rel (0) target = $region25
    $region24: #{tpu_custom_call.1} parent=1 // pred_region
      %263 = dma.done [#allocation4], 64
    $region25: #{tpu_custom_call.1} parent=1 // pred_fallthru
      _
    %264 = vsyncpa [#allocation3], 1
    %265 = vsyncpa [#allocation6], 1
    %266 = vsyncpa [#allocation4], 1

</llo_original>
